<compile_context>
chip_gen: v5e
topology: v5e:2x2
jax: 0.10.0
libtpu: 0.0.40
codegen_flags: <defaults>
</compile_context>

<pallas_src>
import functools

import jax
import jax.numpy as jnp
from jax.experimental import pallas as pl
from jax.experimental.pallas import tpu as pltpu


# Max batch rows (lanes) per grid step.  Review guidance: 16384-32768 on v5e /
# v7x (keep >= 2 grid steps on v7x so both TensorCores are fed), up to 65536
# worth sweeping on v6e.  32768 is a good single default for all three.
TILE_N_MAX = 32768
# Scoped-VMEM cap: footprint at TILE_N=32768 is ~10-12 MB (2x double-buffered
# x tile + hT staging + output tile); 32 MiB leaves ample headroom and is
# below physical VMEM on every generation (64 MiB/TC on v7x).
_VMEM_LIMIT_BYTES = 32 * 1024 * 1024
# Below this many rows the padded kernel launch does mostly wasted work; let
# XLA's fused path handle it.
_MIN_ROWS_FOR_KERNEL = 4096


def two_layer_nn_kernel(xT_ref, w1_ref, b1_ref, w2_ref, b2_ref, o_ref):
    """Fused MLP forward in transposed (batch-on-lanes) layout.

    xT_ref : (in_features, tile_n)  one batch tile, batch on the lane axis
             (f32 or bf16; matmul accumulates in f32 either way)
    w1_ref : (hidden, in_features)  torch layer1.weight layout, whole-resident
    b1_ref : (hidden, 1) f32        layer1.bias as a column (broadcast over lanes)
    w2_ref : (hidden, 1) f32        layer2.weight as a column vector
    b2_ref : (1, 1) f32 in SMEM     layer2.bias scalar
    o_ref  : (1, tile_n) f32        lane-dense output tile (yT)
    """
    xT = xT_ref[...]
    w1 = w1_ref[...]
    b1 = b1_ref[...]
    w2 = w2_ref[...]
    b2 = b2_ref[0, 0]

    # Layer 1 on the MXU with f32 accumulation; bias broadcasts across lanes.
    zT = jnp.dot(w1, xT, preferred_element_type=jnp.float32) + b1   # (hidden, tile_n)

    # Sigmoid via a single tanh per element (EUP); algebraically identical to
    # 1/(1+exp(-z)) but half the EUP ops, so the EUP slot stays off the
    # critical path once the kernel is at the HBM roofline.
    hT = 0.5 * jnp.tanh(0.5 * zT) + 0.5                             # (hidden, tile_n)

    # Layer 2 output width is 1 -> skip the MXU: VPU multiply + cross-sublane
    # (XLU) reduction uses otherwise-idle slots and removes a serial MXU pass.
    yT = jnp.sum(hT * w2, axis=0, keepdims=True) + b2               # (1, tile_n)
    o_ref[...] = yT.astype(o_ref.dtype)


def two_layer_nn_transposed(xT, w1, b1, w2, b2, *, use_bf16=False):
    """Kernel path.  Features are supplied already transposed: xT is
    (in_features, n) with the batch on the minor (lane) axis — the layout the
    review recommends keeping end-to-end so no extra HBM transpose pass is
    needed.  Returns (n, 1) f32."""
    in_features, n = xT.shape
    hidden = w1.shape[0]

    if use_bf16:
        # Halve HBM traffic of the dominant input; matmul still accumulates in
        # f32 inside the kernel (ideally the producer already emits bf16 so
        # this cast is not a separate HBM pass).
        xT = xT.astype(jnp.bfloat16)
        w1 = w1.astype(jnp.bfloat16)

    # Pick the largest tile (<= TILE_N_MAX) that doesn't grossly over-pad a
    # small batch; skip the pad entirely when n is already aligned.
    tile_n = min(TILE_N_MAX, pl.cdiv(n, 512) * 512)
    n_pad = pl.cdiv(n, tile_n) * tile_n
    if n_pad != n:
        xT = jnp.pad(xT, ((0, 0), (0, n_pad - n)))

    b1_col = b1.reshape(hidden, 1).astype(jnp.float32)
    w2_col = w2.reshape(hidden, 1).astype(jnp.float32)
    b2_s = b2.reshape(1, 1).astype(jnp.float32)

    yT = pl.pallas_call(
        two_layer_nn_kernel,
        out_shape=jax.ShapeDtypeStruct((1, n_pad), jnp.float32),
        grid=(n_pad // tile_n,),
        in_specs=[
            # x tile: lane-dense, pipelined/double-buffered across the grid.
            pl.BlockSpec((in_features, tile_n), lambda i: (0, i)),
            pl.BlockSpec((hidden, in_features), lambda i: (0, 0)),   # w1 resident
            pl.BlockSpec((hidden, 1), lambda i: (0, 0)),             # b1 resident
            pl.BlockSpec((hidden, 1), lambda i: (0, 0)),             # w2 resident
            pl.BlockSpec((1, 1), lambda i: (0, 0),
                         memory_space=pltpu.MemorySpace.SMEM),       # b2 scalar
        ],
        out_specs=pl.BlockSpec((1, tile_n), lambda i: (0, i)),        # lane-dense out
        compiler_params=pltpu.CompilerParams(
            # Batch tiles are independent -> shards across v7x's 2 TensorCores.
            dimension_semantics=("parallel",),
            vmem_limit_bytes=_VMEM_LIMIT_BYTES,
        ),
    )(xT, w1, b1_col, w2_col, b2_s)

    # Drop padded columns and restore the PyTorch (n, 1) output shape.
    return yT[0, :n].reshape(n, 1)


def _forward_xla(x, w1, b1, w2, b2):
    """Plain-JAX forward (PyTorch nn.Linear semantics), f32 throughout."""
    h = jax.nn.sigmoid(jnp.dot(x, w1.T, precision="highest") + b1)
    return jnp.dot(h, w2.T, precision="highest") + b2


def two_layer_nn(x, w1, b1, w2, b2, *, use_bf16=False,
                 min_rows_for_kernel=_MIN_ROWS_FOR_KERNEL):
    """y = sigmoid(x @ w1.T + b1) @ w2.T + b2 with PyTorch-layout inputs.

    x  : (n, in_features) f32
    w1 : (hidden, in_features), b1 : (hidden,)
    w2 : (1, hidden),           b2 : (1,)
    returns (n, 1) f32

    Small batches take the plain-XLA fast path (padding + kernel launch would
    be almost entirely wasted work there); large batches are transposed once
    (fusible pad+transpose+optional bf16 cast) and run through the Pallas
    kernel.  Callers that can keep features as (in_features, n) should use
    `two_layer_nn_transposed` directly and skip the transpose pass entirely.
    """
    n = x.shape[0]
    if n < min_rows_for_kernel:
        return _forward_xla(x, w1, b1, w2, b2)          # use_bf16 ignored here
    return two_layer_nn_transposed(x.T, w1, b1, w2, b2, use_bf16=use_bf16)


def init_params(key, input_features=11, hidden_size=32):
    """Deterministic init mimicking torch.nn.Linear default (U[-1/sqrt(fan_in), +]),
    stored in torch layouts: w (out, in), b (out,)."""
    k1, k2, k3, k4 = jax.random.split(key, 4)
    bound1 = 1.0 / jnp.sqrt(jnp.float32(input_features))
    bound2 = 1.0 / jnp.sqrt(jnp.float32(hidden_size))
    w1 = jax.random.uniform(k1, (hidden_size, input_features), jnp.float32,
                            -bound1, bound1)
    b1 = jax.random.uniform(k2, (hidden_size,), jnp.float32, -bound1, bound1)
    w2 = jax.random.uniform(k3, (1, hidden_size), jnp.float32, -bound2, bound2)
    b2 = jax.random.uniform(k4, (1,), jnp.float32, -bound2, bound2)
    return w1, b1, w2, b2


if __name__ == "__main__":
    key = jax.random.PRNGKey(0)
    k_x, k_p, k_x2 = jax.random.split(key, 3)

    input_features, hidden_size = 11, 32
    w1, b1, w2, b2 = init_params(k_p, input_features, hidden_size)
    reference = functools.partial(_forward_xla, w1=w1, b1=b1, w2=w2, b2=b2)

    # --- small demo batch (the PyTorch spec shape), forced through the kernel ---
    n = 8
    x = jax.random.normal(k_x, (n, input_features), jnp.float32)
    out = jax.block_until_ready(two_layer_nn_transposed(x.T, w1, b1, w2, b2))
    assert out.shape == (n, 1)
    assert jnp.allclose(out, reference(x), atol=1e-5, rtol=1e-5)

    # --- public wrapper small-n fast path (plain XLA) ---
    out_fast = jax.block_until_ready(two_layer_nn(x, w1, b1, w2, b2))
    assert out_fast.shape == (n, 1)
    assert jnp.allclose(out_fast, reference(x), atol=1e-5, rtol=1e-5)

    # --- multi-tile + padding path: 40000 rows -> 2 grid steps at TILE_N=32768 ---
    n_big = 40000
    x_big = jax.random.normal(k_x2, (n_big, input_features), jnp.float32)
    out_big = jax.block_until_ready(two_layer_nn(x_big, w1, b1, w2, b2))
    assert out_big.shape == (n_big, 1)
    assert jnp.allclose(out_big, reference(x_big), atol=1e-4, rtol=1e-4)

    # --- bf16-streamed inputs (f32 accumulation); tolerance loosened per review ---
    out_bf16 = jax.block_until_ready(
        two_layer_nn(x_big, w1, b1, w2, b2, use_bf16=True))
    assert out_bf16.shape == (n_big, 1)
    assert jnp.allclose(out_bf16, reference(x_big), atol=5e-2, rtol=5e-2)

    print("KERNEL_OK")
</pallas_src>

<mosaic_0001>
module attributes {stable_mosaic.version = 11 : i64} {
  func.func @two_layer_nn_kernel(%arg0: i32, %arg1: memref<11x512xf32, #tpu.memory_space<vmem>>, %arg2: memref<32x11xf32, #tpu.memory_space<vmem>>, %arg3: memref<32x1xf32, #tpu.memory_space<vmem>>, %arg4: memref<32x1xf32, #tpu.memory_space<vmem>>, %arg5: memref<1x1xf32, #tpu.memory_space<smem>>, %arg6: memref<1x512xf32, #tpu.memory_space<vmem>>) attributes {dimension_semantics = [#tpu.dimension_semantics<parallel>], iteration_bounds = array<i64: 1>, scalar_prefetch = 0 : i64, scratch_operands = 0 : i64, tpu.core_type = #tpu.core_type<tc>, window_params = [{transform_indices = @transform_0, window_bounds = array<i64: 11, 512>}, {pipeline_mode = #tpu.pipeline_mode<synchronous>, transform_indices = @transform_1, window_bounds = array<i64: 32, 11>}, {pipeline_mode = #tpu.pipeline_mode<synchronous>, transform_indices = @transform_2, window_bounds = array<i64: 32, 1>}, {pipeline_mode = #tpu.pipeline_mode<synchronous>, transform_indices = @transform_3, window_bounds = array<i64: 32, 1>}, {transform_indices = @transform_4, window_bounds = array<i64: 1, 1>}, {transform_indices = @transform_5, window_bounds = array<i64: 1, 512>}]} {
    %c0 = arith.constant 0 : index
    %c0_0 = arith.constant 0 : index
    %0 = vector.load %arg1[%c0, %c0_0] : memref<11x512xf32, #tpu.memory_space<vmem>>, vector<11x512xf32>
    %c0_1 = arith.constant 0 : index
    %c0_2 = arith.constant 0 : index
    %1 = vector.load %arg2[%c0_1, %c0_2] : memref<32x11xf32, #tpu.memory_space<vmem>>, vector<32x11xf32>
    %c0_3 = arith.constant 0 : index
    %c0_4 = arith.constant 0 : index
    %2 = vector.load %arg3[%c0_3, %c0_4] : memref<32x1xf32, #tpu.memory_space<vmem>>, vector<32x1xf32>
    %c0_5 = arith.constant 0 : index
    %c0_6 = arith.constant 0 : index
    %3 = vector.load %arg4[%c0_5, %c0_6] : memref<32x1xf32, #tpu.memory_space<vmem>>, vector<32x1xf32>
    %c0_7 = arith.constant 0 : index
    %c0_8 = arith.constant 0 : index
    %4 = memref.load %arg5[%c0_7, %c0_8] : memref<1x1xf32, #tpu.memory_space<smem>>
    %cst = arith.constant dense<0.000000e+00> : vector<32x512xf32>
    %5 = tpu.matmul %1, %0, %cst {dimension_numbers = #tpu.dot_dimension_numbers<[1], [0], [0], [1], [0, 0, 1, 1], [], []>} : vector<32x11xf32>, vector<11x512xf32>, vector<32x512xf32> -> vector<32x512xf32>
    %6 = vector.broadcast %2 : vector<32x1xf32> to vector<32x512xf32>
    %7 = arith.addf %5, %6 : vector<32x512xf32>
    %cst_9 = arith.constant 5.000000e-01 : f32
    %8 = vector.broadcast %cst_9 : f32 to vector<32x512xf32>
    %9 = arith.mulf %8, %7 : vector<32x512xf32>
    %10 = math.tanh %9 : vector<32x512xf32>
    %cst_10 = arith.constant 5.000000e-01 : f32
    %11 = vector.broadcast %cst_10 : f32 to vector<32x512xf32>
    %12 = arith.mulf %11, %10 : vector<32x512xf32>
    %cst_11 = arith.constant 5.000000e-01 : f32
    %13 = vector.broadcast %cst_11 : f32 to vector<32x512xf32>
    %14 = arith.addf %12, %13 : vector<32x512xf32>
    %15 = vector.broadcast %3 : vector<32x1xf32> to vector<32x512xf32>
    %16 = arith.mulf %14, %15 : vector<32x512xf32>
    %cst_12 = arith.constant dense<0.000000e+00> : vector<512xf32>
    %17 = vector.multi_reduction <add>, %16, %cst_12 [0] : vector<32x512xf32> to vector<512xf32>
    %18 = vector.shape_cast %17 : vector<512xf32> to vector<1x512xf32>
    %19 = vector.broadcast %4 : f32 to vector<1x512xf32>
    %20 = arith.addf %18, %19 : vector<1x512xf32>
    %c0_13 = arith.constant 0 : index
    %c0_14 = arith.constant 0 : index
    %21 = vector.load %arg6[%c0_13, %c0_14] : memref<1x512xf32, #tpu.memory_space<vmem>>, vector<1x512xf32>
    tpu.vector_store %arg6[%c0_13, %c0_14], %20 {strides = array<i32>} : memref<1x512xf32, #tpu.memory_space<vmem>>, vector<1x512xf32>,
    return
  }
  func.func @transform_0(%arg0: i32) -> (i32, i32) {
    %c0_i32 = arith.constant 0 : i32
    %c0_i32_0 = arith.constant 0 : i32
    return %c0_i32, %arg0 : i32, i32
  }
  func.func @transform_1(%arg0: i32) -> (i32, i32) {
    %c0_i32 = arith.constant 0 : i32
    %c0_i32_0 = arith.constant 0 : i32
    %c0_i32_1 = arith.constant 0 : i32
    return %c0_i32, %c0_i32_0 : i32, i32
  }
  func.func @transform_2(%arg0: i32) -> (i32, i32) {
    %c0_i32 = arith.constant 0 : i32
    %c0_i32_0 = arith.constant 0 : i32
    %c0_i32_1 = arith.constant 0 : i32
    return %c0_i32, %c0_i32_0 : i32, i32
  }
  func.func @transform_3(%arg0: i32) -> (i32, i32) {
    %c0_i32 = arith.constant 0 : i32
    %c0_i32_0 = arith.constant 0 : i32
    %c0_i32_1 = arith.constant 0 : i32
    return %c0_i32, %c0_i32_0 : i32, i32
  }
  func.func @transform_4(%arg0: i32) -> (i32, i32) {
    %c0_i32 = arith.constant 0 : i32
    %c0_i32_0 = arith.constant 0 : i32
    %c0_i32_1 = arith.constant 0 : i32
    return %c0_i32, %c0_i32_0 : i32, i32
  }
  func.func @transform_5(%arg0: i32) -> (i32, i32) {
    %c0_i32 = arith.constant 0 : i32
    %c0_i32_0 = arith.constant 0 : i32
    return %c0_i32, %arg0 : i32, i32
  }
}

</mosaic_0001>

<llo_original>
// kernel: tpu_custom_call.1
$region0: #{tpu_custom_call.1}
  #allocation0 [shape = 'u32[]', space=smem, size = 0x4, offset = 0x4, fixed_abs, tag = 'smem constant byte address 0x4 - core index']
  #allocation1 [shape = 'u32[72,128]{1,0:T(1,128)}', space=vmem, size = 0x9000, scoped, tag = 'internal scratch']
  #allocation2 [shape = 'f32[1,1]{1,0:T(1,128)S(6)}', space=smem, size = 0x200, scoped, tag = 'scoped memory for tpu_custom_call.1']
  %s0 = inlined_call_operand.vmem [shape: f32[11,512], index: 0, kind: input, shape index: {}]
  %s1 = inlined_call_operand.vmem [shape: f32[32,11], index: 1, kind: input, shape index: {}]
  %s2 = inlined_call_operand.vmem [shape: f32[32,1], index: 2, kind: input, shape index: {}]
  %s3 = inlined_call_operand.vmem [shape: f32[32,1], index: 3, kind: input, shape index: {}]
  %s4 = inlined_call_operand.<no memory space> [shape: f32[1,1], index: 4, kind: input, shape index: {}]
  %s5 = inlined_call_operand.hbm [shape: f32[1,512], index: 5, kind: output, shape index: {}]
  %s6 = sld [smem:[#allocation0]]
  $region30: #{tpu_custom_call.1} parent=0
    _
  %s8 = ssub.s32 1, %s6
  %s9 = scalar_select 0, %s8, %s6
  %10 = sst [smem:[#allocation2]] %s4
  $region1: #{tpu_custom_call.1} parent=0
    #allocation3 [shape = 'u8[2048]{0}', space=vmem, size = 0x800, scoped, tag = 'output window, operand 0, single buffered']
    #allocation4 [shape = 's32[1]{0}', space=sflag, size = 0x4, scoped, tag = 'scoped memory for tpu_custom_call.1']
    %11 = vsyncpa [#allocation4], 0
    // Predicated region
    $region2: #{tpu_custom_call.1} parent=1 // pred_check
      _
    $region3: #{tpu_custom_call.1} parent=1 // pred_check_branch
      %13 = sbr.rel (0) target = $region5
    $region4: #{tpu_custom_call.1} parent=1 // pred_region
      _
    $region5: #{tpu_custom_call.1} parent=1 // pred_fallthru
      _
    // Predicated region
    $region6: #{tpu_custom_call.1} parent=1 // pred_check
      _
    $region7: #{tpu_custom_call.1} parent=1 // pred_check_branch
      %15 = sbr.rel (0) target = $region9
    $region8: #{tpu_custom_call.1} parent=1 // pred_region
      _
    $region9: #{tpu_custom_call.1} parent=1 // pred_fallthru
      _
    // Predicated region
    $region10: #{tpu_custom_call.1} parent=1 // pred_check
      _
    $region11: #{tpu_custom_call.1} parent=1 // pred_check_branch
      %17 = sbr.rel (0) target = $region13
    $region12: #{tpu_custom_call.1} parent=1 // pred_region
      _
    $region13: #{tpu_custom_call.1} parent=1 // pred_fallthru
      _
    // Predicated region
    $region14: #{tpu_custom_call.1} parent=1 // pred_check
      _
    $region15: #{tpu_custom_call.1} parent=1 // pred_check_branch
      %19 = sbr.rel (0) target = $region17
    $region16: #{tpu_custom_call.1} parent=1 // pred_region
      _
    $region17: #{tpu_custom_call.1} parent=1 // pred_fallthru
      _
    // Predicated region
    $region18: #{tpu_custom_call.1} parent=1 // pred_check
      _
    $region19: #{tpu_custom_call.1} parent=1 // pred_check_branch
      %21 = sbr.rel (0) target = $region21
    $region20: #{tpu_custom_call.1} parent=1 // pred_region
      _
    $region21: #{tpu_custom_call.1} parent=1 // pred_fallthru
      _
    %v22 = vld [vmem:[%s0] sm:$0xff]
    %v23 = vld [vmem:[%s0 + $0x8] sm:$0xff]
    %v24 = vld [vmem:[%s0 + $0x10] sm:$0xff]
    %v25 = vld [vmem:[%s0 + $0x18] sm:$0xff]
    %v26 = vld [vmem:[%s0 + $0x20] sm:$0x7]
    %v27 = vld [vmem:[%s0 + $0x28] sm:$0x7]
    %v28 = vld [vmem:[%s0 + $0x30] sm:$0x7]
    %v29 = vld [vmem:[%s0 + $0x38] sm:$0x7]
    %v30 = vld [vmem:[%s1] sm:$0xff]
    %v31 = vld [vmem:[%s1 + $0x8] sm:$0xff]
    %v32 = vld [vmem:[%s1 + $0x10] sm:$0xff]
    %v33 = vld [vmem:[%s1 + $0x18] sm:$0xff]
    %v34 = vld [vmem:[%s2] sm:$0xff]
    %v35 = vld [vmem:[%s2 + $0x8] sm:$0xff]
    %v36 = vld [vmem:[%s2 + $0x10] sm:$0xff]
    %v37 = vld [vmem:[%s2 + $0x18] sm:$0xff]
    %v38 = vld [vmem:[%s3] sm:$0xff]
    %v39 = vld [vmem:[%s3 + $0x8] sm:$0xff]
    %v40 = vld [vmem:[%s3 + $0x10] sm:$0xff]
    %v41 = vld [vmem:[%s3 + $0x18] sm:$0xff]
    %s42 = sld [smem:[#allocation2]]
    %44 = vset.pattern.permute.xlu0 0
    %45 = vperm.xlu0 %44, %v34
    %v46 = vpop.permute.xlu0 %45
    %49 = vset.pattern.permute.xlu0 0
    %50 = vperm.xlu0 %49, %v35
    %v51 = vpop.permute.xlu0 %50
    %54 = vset.pattern.permute.xlu0 0
    %55 = vperm.xlu0 %54, %v36
    %v56 = vpop.permute.xlu0 %55
    %59 = vset.pattern.permute.xlu0 0
    %60 = vperm.xlu0 %59, %v37
    %v61 = vpop.permute.xlu0 %60
    %vm63 = vcmask 89088
    %v65 = vsel %vm63, %v30, 0
    %v68 = vsel %vm63, %v31, 0
    %v71 = vsel %vm63, %v32, 0
    %v74 = vsel %vm63, %v33, 0
    %vm76 = vcmask 1042432
    %v78 = vsel %vm76, %v26, 0
    %v81 = vsel %vm76, %v27, 0
    %v84 = vsel %vm76, %v28, 0
    %v87 = vsel %vm76, %v29, 0
    %89 = vmatpush.msra.mxu0 0.0
    %90 = vmatpush.msra.mxu0 0.0
    %91 = vmatpush.msra.mxu0 0.0
    %92 = vmatpush.msra.mxu0 0.0
    %93 = vmatpush.msra.mxu0 0.0
    %94 = vmatpush.msra.mxu0 0.0
    %95 = vmatpush.msra.mxu0 0.0
    %96 = vmatpush.msra.mxu0 0.0
    %97 = vmatpush.msra.mxu0 0.0
    %98 = vmatpush.msra.mxu0 0.0
    %99 = vmatpush.msra.mxu0 0.0
    %100 = vmatpush.msra.mxu0 0.0
    %101 = vmatpush.msra.mxu0 0.0
    %102 = vmatpush.msra.mxu0 0.0
    %103 = vmatpush.msra.mxu0 %v78
    %104 = vmatpush.msra.mxu0 %v22
    %105 = vmatmul.f32.gmra.mxu0 %v65
    %v106 = vpop.f32.mrf.mxu0
    %v107 = vadd.f32 %v46, %v106
    %108 = vmatmul.f32.gmra.mxu0 %v68
    %v109 = vpop.f32.mrf.mxu0
    %v110 = vadd.f32 %v51, %v109
    %111 = vmatmul.f32.gmra.mxu0 %v71
    %v112 = vpop.f32.mrf.mxu0
    %v113 = vadd.f32 %v56, %v112
    %114 = vmatmul.f32.gmra.mxu0 %v74
    %v115 = vpop.f32.mrf.mxu0
    %v116 = vadd.f32 %v61, %v115
    %117 = vdwg.mxu0
    %118 = vmatpush.msra.mxu0 0.0
    %119 = vmatpush.msra.mxu0 0.0
    %120 = vmatpush.msra.mxu0 0.0
    %121 = vmatpush.msra.mxu0 0.0
    %122 = vmatpush.msra.mxu0 0.0
    %123 = vmatpush.msra.mxu0 0.0
    %124 = vmatpush.msra.mxu0 0.0
    %125 = vmatpush.msra.mxu0 0.0
    %126 = vmatpush.msra.mxu0 0.0
    %127 = vmatpush.msra.mxu0 0.0
    %128 = vmatpush.msra.mxu0 0.0
    %129 = vmatpush.msra.mxu0 0.0
    %130 = vmatpush.msra.mxu0 0.0
    %131 = vmatpush.msra.mxu0 0.0
    %132 = vmatpush.msra.mxu0 %v81
    %133 = vmatpush.msra.mxu0 %v23
    %134 = vmatmul.f32.gmra.mxu0 %v65
    %v135 = vpop.f32.mrf.mxu0
    %v136 = vadd.f32 %v46, %v135
    %137 = vmatmul.f32.gmra.mxu0 %v68
    %v138 = vpop.f32.mrf.mxu0
    %v139 = vadd.f32 %v51, %v138
    %140 = vmatmul.f32.gmra.mxu0 %v71
    %v141 = vpop.f32.mrf.mxu0
    %v142 = vadd.f32 %v56, %v141
    %143 = vmatmul.f32.gmra.mxu0 %v74
    %v144 = vpop.f32.mrf.mxu0
    %v145 = vadd.f32 %v61, %v144
    %146 = vdwg.mxu0
    %147 = vmatpush.msra.mxu0 0.0
    %148 = vmatpush.msra.mxu0 0.0
    %149 = vmatpush.msra.mxu0 0.0
    %150 = vmatpush.msra.mxu0 0.0
    %151 = vmatpush.msra.mxu0 0.0
    %152 = vmatpush.msra.mxu0 0.0
    %153 = vmatpush.msra.mxu0 0.0
    %154 = vmatpush.msra.mxu0 0.0
    %155 = vmatpush.msra.mxu0 0.0
    %156 = vmatpush.msra.mxu0 0.0
    %157 = vmatpush.msra.mxu0 0.0
    %158 = vmatpush.msra.mxu0 0.0
    %159 = vmatpush.msra.mxu0 0.0
    %160 = vmatpush.msra.mxu0 0.0
    %161 = vmatpush.msra.mxu0 %v84
    %162 = vmatpush.msra.mxu0 %v24
    %163 = vmatmul.f32.gmra.mxu0 %v65
    %v164 = vpop.f32.mrf.mxu0
    %v165 = vadd.f32 %v46, %v164
    %166 = vmatmul.f32.gmra.mxu0 %v68
    %v167 = vpop.f32.mrf.mxu0
    %v168 = vadd.f32 %v51, %v167
    %169 = vmatmul.f32.gmra.mxu0 %v71
    %v170 = vpop.f32.mrf.mxu0
    %v171 = vadd.f32 %v56, %v170
    %172 = vmatmul.f32.gmra.mxu0 %v74
    %v173 = vpop.f32.mrf.mxu0
    %v174 = vadd.f32 %v61, %v173
    %175 = vdwg.mxu0
    %176 = vmatpush.msra.mxu0 0.0
    %177 = vmatpush.msra.mxu0 0.0
    %178 = vmatpush.msra.mxu0 0.0
    %179 = vmatpush.msra.mxu0 0.0
    %180 = vmatpush.msra.mxu0 0.0
    %181 = vmatpush.msra.mxu0 0.0
    %182 = vmatpush.msra.mxu0 0.0
    %183 = vmatpush.msra.mxu0 0.0
    %184 = vmatpush.msra.mxu0 0.0
    %185 = vmatpush.msra.mxu0 0.0
    %186 = vmatpush.msra.mxu0 0.0
    %187 = vmatpush.msra.mxu0 0.0
    %188 = vmatpush.msra.mxu0 0.0
    %189 = vmatpush.msra.mxu0 0.0
    %190 = vmatpush.msra.mxu0 %v87
    %191 = vmatpush.msra.mxu0 %v25
    %192 = vmatmul.f32.gmra.mxu0 %v65
    %v193 = vpop.f32.mrf.mxu0
    %v194 = vadd.f32 %v46, %v193
    %195 = vmatmul.f32.gmra.mxu0 %v68
    %v196 = vpop.f32.mrf.mxu0
    %v197 = vadd.f32 %v51, %v196
    %198 = vmatmul.f32.gmra.mxu0 %v71
    %v199 = vpop.f32.mrf.mxu0
    %v200 = vadd.f32 %v56, %v199
    %201 = vmatmul.f32.gmra.mxu0 %v74
    %v202 = vpop.f32.mrf.mxu0
    %v203 = vadd.f32 %v61, %v202
    %204 = vdwg.mxu0
    %v205 = vmul.f32 %v107, 0.5
    %v206 = vmul.f32 %v136, 0.5
    %v207 = vmul.f32 %v165, 0.5
    %v208 = vmul.f32 %v194, 0.5
    %v209 = vmul.f32 %v110, 0.5
    %v210 = vmul.f32 %v139, 0.5
    %v211 = vmul.f32 %v168, 0.5
    %v212 = vmul.f32 %v197, 0.5
    %v213 = vmul.f32 %v113, 0.5
    %v214 = vmul.f32 %v142, 0.5
    %v215 = vmul.f32 %v171, 0.5
    %v216 = vmul.f32 %v200, 0.5
    %v217 = vmul.f32 %v116, 0.5
    %v218 = vmul.f32 %v145, 0.5
    %v219 = vmul.f32 %v174, 0.5
    %v220 = vmul.f32 %v203, 0.5
    %v221 = vtanh.pop %v205
    %v222 = vtanh.pop %v206
    %v223 = vtanh.pop %v207
    %v224 = vtanh.pop %v208
    %v225 = vtanh.pop %v209
    %v226 = vtanh.pop %v210
    %v227 = vtanh.pop %v211
    %v228 = vtanh.pop %v212
    %v229 = vtanh.pop %v213
    %v230 = vtanh.pop %v214
    %v231 = vtanh.pop %v215
    %v232 = vtanh.pop %v216
    %v233 = vtanh.pop %v217
    %v234 = vtanh.pop %v218
    %v235 = vtanh.pop %v219
    %v236 = vtanh.pop %v220
    %v237 = vmul.f32 %v221, 0.5
    %v238 = vmul.f32 %v222, 0.5
    %v239 = vmul.f32 %v223, 0.5
    %v240 = vmul.f32 %v224, 0.5
    %v241 = vmul.f32 %v225, 0.5
    %v242 = vmul.f32 %v226, 0.5
    %v243 = vmul.f32 %v227, 0.5
    %v244 = vmul.f32 %v228, 0.5
    %v245 = vmul.f32 %v229, 0.5
    %v246 = vmul.f32 %v230, 0.5
    %v247 = vmul.f32 %v231, 0.5
    %v248 = vmul.f32 %v232, 0.5
    %v249 = vmul.f32 %v233, 0.5
    %v250 = vmul.f32 %v234, 0.5
    %v251 = vmul.f32 %v235, 0.5
    %v252 = vmul.f32 %v236, 0.5
    %v253 = vadd.f32 %v237, 0.5
    %v254 = vadd.f32 %v238, 0.5
    %v255 = vadd.f32 %v239, 0.5
    %v256 = vadd.f32 %v240, 0.5
    %v257 = vadd.f32 %v241, 0.5
    %v258 = vadd.f32 %v242, 0.5
    %v259 = vadd.f32 %v243, 0.5
    %v260 = vadd.f32 %v244, 0.5
    %v261 = vadd.f32 %v245, 0.5
    %v262 = vadd.f32 %v246, 0.5
    %v263 = vadd.f32 %v247, 0.5
    %v264 = vadd.f32 %v248, 0.5
    %v265 = vadd.f32 %v249, 0.5
    %v266 = vadd.f32 %v250, 0.5
    %v267 = vadd.f32 %v251, 0.5
    %v268 = vadd.f32 %v252, 0.5
    %270 = vset.pattern.permute.xlu0 0
    %271 = vperm.xlu0 %270, %v38
    %v272 = vpop.permute.xlu0 %271
    %275 = vset.pattern.permute.xlu0 0
    %276 = vperm.xlu0 %275, %v39
    %v277 = vpop.permute.xlu0 %276
    %280 = vset.pattern.permute.xlu0 0
    %281 = vperm.xlu0 %280, %v40
    %v282 = vpop.permute.xlu0 %281
    %285 = vset.pattern.permute.xlu0 0
    %286 = vperm.xlu0 %285, %v41
    %v287 = vpop.permute.xlu0 %286
    %v289 = vmul.f32 %v253, %v272
    %v290 = vmul.f32 %v254, %v272
    %v291 = vmul.f32 %v255, %v272
    %v292 = vmul.f32 %v256, %v272
    %v293 = vmul.f32 %v257, %v277
    %v294 = vmul.f32 %v258, %v277
    %v295 = vmul.f32 %v259, %v277
    %v296 = vmul.f32 %v260, %v277
    %v297 = vmul.f32 %v261, %v282
    %v298 = vmul.f32 %v262, %v282
    %v299 = vmul.f32 %v263, %v282
    %v300 = vmul.f32 %v264, %v282
    %v301 = vmul.f32 %v265, %v287
    %v302 = vmul.f32 %v266, %v287
    %v303 = vmul.f32 %v267, %v287
    %v304 = vmul.f32 %v268, %v287
    %v305 = vadd.f32 %v289, %v293
    %v306 = vadd.f32 %v305, %v297
    %v307 = vadd.f32 %v306, %v301
    %v308 = vrot.slane %v307, 4
    %v309 = vadd.f32 %v307, %v308
    %v310 = vrot.slane %v309, 2
    %v311 = vadd.f32 %v309, %v310
    %v312 = vrot.slane %v311, 1
    %v313 = vadd.f32 %v311, %v312
    %v314 = vadd.f32 %v290, %v294
    %v315 = vadd.f32 %v314, %v298
    %v316 = vadd.f32 %v315, %v302
    %v317 = vrot.slane %v316, 4
    %v318 = vadd.f32 %v316, %v317
    %v319 = vrot.slane %v318, 2
    %v320 = vadd.f32 %v318, %v319
    %v321 = vrot.slane %v320, 1
    %v322 = vadd.f32 %v320, %v321
    %v323 = vadd.f32 %v291, %v295
    %v324 = vadd.f32 %v323, %v299
    %v325 = vadd.f32 %v324, %v303
    %v326 = vrot.slane %v325, 4
    %v327 = vadd.f32 %v325, %v326
    %v328 = vrot.slane %v327, 2
    %v329 = vadd.f32 %v327, %v328
    %v330 = vrot.slane %v329, 1
    %v331 = vadd.f32 %v329, %v330
    %v332 = vadd.f32 %v292, %v296
    %v333 = vadd.f32 %v332, %v300
    %v334 = vadd.f32 %v333, %v304
    %v335 = vrot.slane %v334, 4
    %v336 = vadd.f32 %v334, %v335
    %v337 = vrot.slane %v336, 2
    %v338 = vadd.f32 %v336, %v337
    %v339 = vrot.slane %v338, 1
    %v340 = vadd.f32 %v338, %v339
    %v341 = vstv %s42
    %v342 = vadd.f32 %v313, %v341
    %v343 = vadd.f32 %v322, %v341
    %v344 = vadd.f32 %v331, %v341
    %v345 = vadd.f32 %v340, %v341
    %v350 = vrot.slane %v343, 7
    %v351 = vrot.slane %v344, 6
    %v352 = vrot.slane %v345, 5
    %vm353 = vcmask 1040384
    %v354 = vsel %vm353, %v342, %v350
    %vm355 = vcmask 1042434
    %v356 = vsel %vm355, %v351, %v352
    %vm357 = vcmask 1041408
    %v358 = vsel %vm357, %v354, %v356
    %v360 = vlaneseq
    %vm361 = vcmp.ge.s32.totalorder %v360, 0
    %vm362 = vcmp.lt.s32.totalorder %v360, 512
    %vm363 = vmand %vm361, %vm362
    %364 = vst.msk [vmem:[#allocation3] sm:$0xf] %vm363, %v358
    // Predicated region
    $region22: #{tpu_custom_call.1} parent=1 // pred_check
      _
    $region23: #{tpu_custom_call.1} parent=1 // pred_check_branch
      %366 = sbr.rel (0) target = $region25
    $region24: #{tpu_custom_call.1} parent=1 // pred_region
      %368 = vsyncadd [#allocation4], 0
      %s370 = sshll.u32 [#allocation3], 4
      %s371 = int_to_ptr.vmem [resolvable:$true] %s370
      %s372 = sshll.u32 %s5, 4
      %s373 = int_to_ptr.hbm [resolvable:$true] %s372
      %375 = dma.vmem_to_hbm [thread:$0]  %s371, 64, %s373, [#allocation4]
    $region25: #{tpu_custom_call.1} parent=1 // pred_fallthru
      _
    // Predicated region
    $region26: #{tpu_custom_call.1} parent=1 // pred_check
      _
    $region27: #{tpu_custom_call.1} parent=1 // pred_check_branch
      %377 = sbr.rel (0) target = $region29
    $region28: #{tpu_custom_call.1} parent=1 // pred_region
      %379 = dma.done [#allocation4], 64
    $region29: #{tpu_custom_call.1} parent=1 // pred_fallthru
      _
    %380 = vsyncpa [#allocation4], 1

</llo_original>
